<compile_context>
chip_gen: v6e
topology: v6e:2x2x1
jax: 0.10.0
libtpu: 0.0.40
codegen_flags: <defaults>
</compile_context>

<pallas_src>
import numpy as np
import jax
import jax.numpy as jnp
from jax.experimental import pallas as pl
from jax.experimental.pallas import tpu as pltpu


# ----------------------------- helpers -------------------------------------

def _pick_tile(n, target):
    """Largest row tile <= target that divides n and is a multiple of 8
    (falls back to the full extent)."""
    if n <= target:
        return n
    for d in range(target, 7, -1):
        if n % d == 0 and d % 8 == 0:
            return d
    return n


def _interp_matrix(out_size, in_size):
    """1-D bilinear interpolation matrix, PyTorch align_corners=True."""
    A = np.zeros((out_size, in_size), np.float32)
    i = np.arange(out_size)
    if out_size > 1:
        c = i * (in_size - 1) / (out_size - 1)
    else:
        c = np.zeros(out_size, np.float64)
    lo = np.clip(np.floor(c).astype(np.int64), 0, in_size - 1)
    hi = np.minimum(lo + 1, in_size - 1)
    w = (c - lo).astype(np.float32)
    A[i, lo] += (1.0 - w)
    A[i, hi] += w
    return A


# ----------------------------- Pallas kernels ------------------------------

def _conv1x1_kernel(x_ref, w_ref, s_ref, b_ref, o_ref):
    """relu((x @ w) * scale + bias) on one row tile (bf16 MXU, f32 epilogue)."""
    acc = jnp.dot(x_ref[...], w_ref[...], preferred_element_type=jnp.float32)
    o_ref[...] = jnp.maximum(acc * s_ref[...] + b_ref[...], 0.0).astype(o_ref.dtype)


def conv1x1_bn_relu(x2d, w, scale, bias, row_target=512):
    """x2d: (M, Cin) bf16 -> (M, OC) bf16.  Row-tiled, auto-pipelined matmul."""
    M, K = x2d.shape
    OC = w.shape[1]
    tm = _pick_tile(M, row_target)
    return pl.pallas_call(
        _conv1x1_kernel,
        out_shape=jax.ShapeDtypeStruct((M, OC), jnp.bfloat16),
        grid=(M // tm,),
        in_specs=[
            pl.BlockSpec((tm, K), lambda m: (m, 0)),
            pl.BlockSpec((K, OC), lambda m: (0, 0)),
            pl.BlockSpec((1, OC), lambda m: (0, 0)),
            pl.BlockSpec((1, OC), lambda m: (0, 0)),
        ],
        out_specs=pl.BlockSpec((tm, OC), lambda m: (m, 0)),
        compiler_params=pltpu.CompilerParams(dimension_semantics=("parallel",)),
    )(x2d, w, scale.reshape(1, OC), bias.reshape(1, OC))


def _merge_kernel(x_ref, m_ref, w_ref, s_ref, b_ref, ah_ref, aw_ref, o_ref):
    """Fused FPN top-down merge for one (batch, row-tile):
         out = relu((x @ w1) * scale + bias) + bilinear_up2x(m_coarse)[rows]
       The upsample is separable: a batched (Wi,Wj)@(Wj,OC) matmul per coarse
       row (W direction), then a single (th,Hj)@(Hj, Wi*OC) matmul (H dir)."""
    th, Wi, Cin = x_ref.shape
    Hj, Wj, OC = m_ref.shape
    # in_branch: 1x1 conv + folded BN + ReLU on this row tile
    p = jnp.dot(x_ref[...].reshape(th * Wi, Cin), w_ref[...],
                preferred_element_type=jnp.float32)
    p = jnp.maximum(p * s_ref[...] + b_ref[...], 0.0).reshape(th, Wi, OC)
    # separable bilinear (align_corners) upsample of the coarser merged map
    mc = m_ref[...].astype(jnp.float32)                       # (Hj, Wj, OC)
    awb = jnp.broadcast_to(aw_ref[...], (Hj, Wi, Wj))
    t = jnp.einsum('gvw,gwc->gvc', awb, mc,
                   preferred_element_type=jnp.float32)        # (Hj, Wi, OC)
    u = jnp.dot(ah_ref[...], t.reshape(Hj, Wi * OC),
                preferred_element_type=jnp.float32).reshape(th, Wi, OC)
    o_ref[...] = (p + u).astype(o_ref.dtype)


def merge_level(x, m_coarse, w1, scale, bias, ah, aw, row_target=128):
    """x: (B,Hi,Wi,Cin) raw feature (bf16); m_coarse: (B,Hj,Wj,OC) bf16.
       Returns M_i = relu(BN(conv1x1(x))) + up2x(m_coarse) as bf16."""
    B, Hi, Wi, Cin = x.shape
    _, Hj, Wj, OC = m_coarse.shape
    th = _pick_tile(Hi, row_target)
    return pl.pallas_call(
        _merge_kernel,
        out_shape=jax.ShapeDtypeStruct((B, Hi, Wi, OC), jnp.bfloat16),
        grid=(B, Hi // th),
        in_specs=[
            pl.BlockSpec((None, th, Wi, Cin), lambda b, h: (b, h, 0, 0)),
            pl.BlockSpec((None, Hj, Wj, OC), lambda b, h: (b, 0, 0, 0)),
            pl.BlockSpec((Cin, OC), lambda b, h: (0, 0)),
            pl.BlockSpec((1, OC), lambda b, h: (0, 0)),
            pl.BlockSpec((1, OC), lambda b, h: (0, 0)),
            pl.BlockSpec((th, Hj), lambda b, h: (h, 0)),
            pl.BlockSpec((Wi, Wj), lambda b, h: (0, 0)),
        ],
        out_specs=pl.BlockSpec((None, th, Wi, OC), lambda b, h: (b, h, 0, 0)),
        compiler_params=pltpu.CompilerParams(
            dimension_semantics=("parallel", "parallel")),
    )(x, m_coarse, w1, scale.reshape(1, OC), bias.reshape(1, OC), ah, aw)


def _make_out_branch_kernel(Hi, Wi, OC, hidden, H0, W0, do_up):
    def kernel(mp_ref, w_ref, s_ref, b_ref, *rest):
        if do_up:
            ah_ref, aw_ref, o_ref = rest
        else:
            (o_ref,) = rest
        x = mp_ref[...]                                        # (Hi+2, Wi+2, OC) bf16
        # 3x3 conv as 9 shifted MXU accumulations (no HBM im2col)
        acc = jnp.zeros((Hi * Wi, hidden), jnp.float32)
        for t in range(9):
            ky, kx = t // 3, t % 3
            patch = x[ky:ky + Hi, kx:kx + Wi, :].reshape(Hi * Wi, OC)
            acc = acc + jnp.dot(patch, w_ref[t],
                                preferred_element_type=jnp.float32)
        y = jnp.maximum(acc * s_ref[...] + b_ref[...], 0.0)    # f32
        y = y.reshape(Hi, Wi, hidden)
        if do_up:
            # separable bilinear upsample to (H0, W0), fused in the epilogue
            awb = jnp.broadcast_to(aw_ref[...], (Hi, W0, Wi))
            t1 = jnp.einsum('gvw,gwc->gvc', awb, y,
                            preferred_element_type=jnp.float32)     # (Hi, W0, h)
            y = jnp.dot(ah_ref[...], t1.reshape(Hi, W0 * hidden),
                        preferred_element_type=jnp.float32).reshape(H0, W0, hidden)
        o_ref[...] = y.astype(o_ref.dtype)
    return kernel


def out_branch(m_padded, w_taps, scale, bias, ah, aw, out_hw):
    """m_padded: (B, Hi+2, Wi+2, OC) bf16 (zero-padded); w_taps: (9, OC, hidden)
       bf16.  Returns upsample(relu(BN(conv3x3(m)))) at (B, H0, W0, hidden) f32."""
    B, Hp, Wp, OC = m_padded.shape
    Hi, Wi = Hp - 2, Wp - 2
    hidden = w_taps.shape[-1]
    H0, W0 = out_hw
    do_up = ah is not None
    kernel = _make_out_branch_kernel(Hi, Wi, OC, hidden, H0, W0, do_up)
    in_specs = [
        pl.BlockSpec((None, Hp, Wp, OC), lambda b: (b, 0, 0, 0)),
        pl.BlockSpec((9, OC, hidden), lambda b: (0, 0, 0)),
        pl.BlockSpec((1, hidden), lambda b: (0, 0)),
        pl.BlockSpec((1, hidden), lambda b: (0, 0)),
    ]
    args = [m_padded, w_taps, scale.reshape(1, hidden), bias.reshape(1, hidden)]
    if do_up:
        in_specs += [pl.BlockSpec((H0, Hi), lambda b: (0, 0)),
                     pl.BlockSpec((W0, Wi), lambda b: (0, 0))]
        args += [ah, aw]
    return pl.pallas_call(
        kernel,
        out_shape=jax.ShapeDtypeStruct((B, H0, W0, hidden), jnp.float32),
        grid=(B,),
        in_specs=in_specs,
        out_specs=pl.BlockSpec((None, H0, W0, hidden), lambda b: (b, 0, 0, 0)),
        compiler_params=pltpu.CompilerParams(dimension_semantics=("parallel",)),
    )(*args)


# ------------------------- parameters (folded BN) ---------------------------

def init_params(key, list_in_channels, out_channels, level_shapes):
    N = len(list_in_channels)
    assert out_channels % N == 0
    hidden = out_channels // N
    eps = 1e-5
    keys = iter(jax.random.split(key, 12 * N))
    p = {"w1": [], "scale1": [], "bias1": [],
         "w3": [], "w3_taps": [], "scale3": [], "bias3": [],
         "ah_merge": [None] * N, "aw_merge": [None] * N,
         "ah_out": [None] * N, "aw_out": [None] * N, "hidden": hidden}

    for cin in list_in_channels:
        # in_branch: Conv2d(cin, OC, 1, bias=False) + BN(OC) (eval mode, folded)
        w1 = (jax.random.normal(next(keys), (cin, out_channels), jnp.float32)
              * 0.2).astype(jnp.bfloat16)
        g1 = jax.random.uniform(next(keys), (out_channels,), jnp.float32, 0.5, 1.5)
        b1 = jax.random.normal(next(keys), (out_channels,), jnp.float32) * 0.1
        m1 = jax.random.normal(next(keys), (out_channels,), jnp.float32) * 0.1
        v1 = jax.random.uniform(next(keys), (out_channels,), jnp.float32, 0.5, 1.5)
        s1 = g1 / jnp.sqrt(v1 + eps)
        p["w1"].append(w1)
        p["scale1"].append(s1)
        p["bias1"].append(b1 - m1 * s1)

        # out_branch: Conv2d(OC, hidden, 3, pad=1, bias=False) + BN(hidden)
        w3 = (jax.random.normal(next(keys), (3, 3, out_channels, hidden),
                                jnp.float32) * 0.1).astype(jnp.bfloat16)   # HWIO
        g3 = jax.random.uniform(next(keys), (hidden,), jnp.float32, 0.5, 1.5)
        b3 = jax.random.normal(next(keys), (hidden,), jnp.float32) * 0.1
        m3 = jax.random.normal(next(keys), (hidden,), jnp.float32) * 0.1
        v3 = jax.random.uniform(next(keys), (hidden,), jnp.float32, 0.5, 1.5)
        s3 = g3 / jnp.sqrt(v3 + eps)
        p["w3"].append(w3)
        p["w3_taps"].append(w3.reshape(9, out_channels, hidden))
        p["scale3"].append(s3)
        p["bias3"].append(b3 - m3 * s3)

    # separable 1-D interp matrices (replaces the old dense kron matrices)
    for i in range(N - 1):   # merge: level i+1 (coarse) -> level i (fine), x2
        p["ah_merge"][i] = jnp.asarray(
            _interp_matrix(level_shapes[i][0], level_shapes[i + 1][0]))
        p["aw_merge"][i] = jnp.asarray(
            _interp_matrix(level_shapes[i][1], level_shapes[i + 1][1]))
    for i in range(1, N):    # out-branch: level i -> level 0, x 2**i
        p["ah_out"][i] = jnp.asarray(
            _interp_matrix(level_shapes[0][0], level_shapes[i][0]))
        p["aw_out"][i] = jnp.asarray(
            _interp_matrix(level_shapes[0][1], level_shapes[i][1]))
    return p


# --------------------------------- forward ----------------------------------

def fpn_forward(features_nchw, p):
    """Pallas implementation of FeaturePyramidNeck.forward (eval-mode BN)."""
    N = len(features_nchw)
    # TODO(synk): read NCHW directly inside the kernels instead of transposing here.
    feats = [jnp.transpose(f, (0, 2, 3, 1)).astype(jnp.bfloat16)
             for f in features_nchw]                                  # -> NHWC bf16
    B, H0, W0, _ = feats[0].shape
    OC = p["w1"][0].shape[1]

    M = [None] * N
    # top level: plain 1x1 conv + BN + ReLU (no add)
    xT = feats[N - 1]
    _, Ht, Wt, Ct = xT.shape
    yT = conv1x1_bn_relu(xT.reshape(B * Ht * Wt, Ct),
                         p["w1"][N - 1], p["scale1"][N - 1], p["bias1"][N - 1])
    M[N - 1] = yT.reshape(B, Ht, Wt, OC)

    # top-down merges: fused 1x1 conv + separable 2x upsample + add
    for i in range(N - 2, -1, -1):
        M[i] = merge_level(feats[i], M[i + 1], p["w1"][i],
                           p["scale1"][i], p["bias1"][i],
                           p["ah_merge"][i], p["aw_merge"][i])

    # out-branch: fused 3x3 conv + BN + ReLU + separable upsample(2**i)
    outs = []
    for i in range(N):
        mp = jnp.pad(M[i], ((0, 0), (1, 1), (1, 1), (0, 0)))
        outs.append(out_branch(mp, p["w3_taps"][i], p["scale3"][i], p["bias3"][i],
                               p["ah_out"][i], p["aw_out"][i], (H0, W0)))
    # TODO(synk): write channel-offset slices of a single NCHW output directly
    # from the out-branch kernels (out_specs over the channel axis) to drop this
    # concat + transpose.
    out = jnp.concatenate(outs, axis=-1)                     # (B, H0, W0, OC) f32
    return jnp.transpose(out, (0, 3, 1, 2))                  # NCHW, = torch.cat(dim=1)


# ----------------------- plain-JAX reference (check) -----------------------

def fpn_reference(features_nchw, p, level_shapes):
    N = len(features_nchw)
    dn = ("NHWC", "HWIO", "NHWC")
    feats = [jnp.transpose(f, (0, 2, 3, 1)).astype(jnp.bfloat16)
             for f in features_nchw]
    OC = p["w1"][0].shape[1]

    def up(x_f32, out_hw):
        Ah = jnp.asarray(_interp_matrix(out_hw[0], x_f32.shape[1]))
        Aw = jnp.asarray(_interp_matrix(out_hw[1], x_f32.shape[2]))
        return jnp.einsum("ip,jq,bpqc->bijc", Ah, Aw, x_f32)

    def in_branch(i, x):
        cin = x.shape[-1]
        y = jax.lax.conv_general_dilated(
            x, p["w1"][i].reshape(1, 1, cin, OC), (1, 1), "VALID",
            dimension_numbers=dn, preferred_element_type=jnp.float32)
        return jnp.maximum(y * p["scale1"][i] + p["bias1"][i], 0.0)

    M = [None] * N
    M[N - 1] = in_branch(N - 1, feats[N - 1]).astype(jnp.bfloat16)
    for i in range(N - 2, -1, -1):
        pi = in_branch(i, feats[i])
        ui = up(M[i + 1].astype(jnp.float32), level_shapes[i])
        M[i] = (pi + ui).astype(jnp.bfloat16)

    outs = []
    for i in range(N):
        y = jax.lax.conv_general_dilated(
            M[i], p["w3"][i], (1, 1), ((1, 1), (1, 1)),
            dimension_numbers=dn, preferred_element_type=jnp.float32)
        y = jnp.maximum(y * p["scale3"][i] + p["bias3"][i], 0.0)
        if i > 0:
            y = up(y, level_shapes[0])
        outs.append(y)
    return jnp.transpose(jnp.concatenate(outs, axis=-1), (0, 3, 1, 2))


# ----------------------------------- main -----------------------------------

if __name__ == "__main__":
    key = jax.random.PRNGKey(0)
    list_in_channels = [4, 6, 8, 12]
    out_channels = 16                      # hidden = 4
    B, H0, W0 = 2, 16, 16
    N = len(list_in_channels)
    level_shapes = [(H0 // 2 ** i, W0 // 2 ** i) for i in range(N)]

    k_feat, k_par = jax.random.split(key)
    fkeys = jax.random.split(k_feat, N)
    # PyTorch-style NCHW inputs
    features = [jax.random.normal(fkeys[i], (B, c, h, w), jnp.float32)
                for i, (c, (h, w)) in enumerate(zip(list_in_channels, level_shapes))]

    params = init_params(k_par, list_in_channels, out_channels, level_shapes)

    out = jax.block_until_ready(fpn_forward(features, params))
    assert out.shape == (B, out_channels, H0, W0), out.shape

    ref = jax.block_until_ready(fpn_reference(features, params, level_shapes))
    err = float(jnp.max(jnp.abs(out - ref)))
    scale = float(jnp.max(jnp.abs(ref))) + 1.0
    assert np.isfinite(err) and err <= 1e-2 * scale, f"mismatch: max|diff|={err}"

    print("KERNEL_OK")
</pallas_src>

<mosaic_0001>
module attributes {stable_mosaic.version = 11 : i64} {
  func.func @_conv1x1_kernel(%arg0: i32, %arg1: memref<8x12xbf16, #tpu.memory_space<vmem>>, %arg2: memref<12x16xbf16, #tpu.memory_space<vmem>>, %arg3: memref<1x16xf32, #tpu.memory_space<vmem>>, %arg4: memref<1x16xf32, #tpu.memory_space<vmem>>, %arg5: memref<8x16xbf16, #tpu.memory_space<vmem>>) attributes {dimension_semantics = [#tpu.dimension_semantics<parallel>], iteration_bounds = array<i64: 1>, scalar_prefetch = 0 : i64, scratch_operands = 0 : i64, tpu.core_type = #tpu.core_type<tc>, window_params = [{transform_indices = @transform_0, window_bounds = array<i64: 8, 12>}, {pipeline_mode = #tpu.pipeline_mode<synchronous>, transform_indices = @transform_1, window_bounds = array<i64: 12, 16>}, {pipeline_mode = #tpu.pipeline_mode<synchronous>, transform_indices = @transform_2, window_bounds = array<i64: 1, 16>}, {pipeline_mode = #tpu.pipeline_mode<synchronous>, transform_indices = @transform_3, window_bounds = array<i64: 1, 16>}, {transform_indices = @transform_4, window_bounds = array<i64: 8, 16>}]} {
    %c0 = arith.constant 0 : index
    %c0_0 = arith.constant 0 : index
    %0 = vector.load %arg1[%c0, %c0_0] : memref<8x12xbf16, #tpu.memory_space<vmem>>, vector<8x12xbf16>
    %c0_1 = arith.constant 0 : index
    %c0_2 = arith.constant 0 : index
    %1 = vector.load %arg2[%c0_1, %c0_2] : memref<12x16xbf16, #tpu.memory_space<vmem>>, vector<12x16xbf16>
    %cst = arith.constant dense<0.000000e+00> : vector<8x16xf32>
    %2 = tpu.matmul %0, %1, %cst {dimension_numbers = #tpu.dot_dimension_numbers<[1], [0], [0], [1], [0, 0, 1, 1], [], []>} : vector<8x12xbf16>, vector<12x16xbf16>, vector<8x16xf32> -> vector<8x16xf32>
    %c0_3 = arith.constant 0 : index
    %c0_4 = arith.constant 0 : index
    %3 = vector.load %arg3[%c0_3, %c0_4] : memref<1x16xf32, #tpu.memory_space<vmem>>, vector<1x16xf32>
    %4 = vector.broadcast %3 : vector<1x16xf32> to vector<8x16xf32>
    %5 = arith.mulf %2, %4 : vector<8x16xf32>
    %c0_5 = arith.constant 0 : index
    %c0_6 = arith.constant 0 : index
    %6 = vector.load %arg4[%c0_5, %c0_6] : memref<1x16xf32, #tpu.memory_space<vmem>>, vector<1x16xf32>
    %7 = vector.broadcast %6 : vector<1x16xf32> to vector<8x16xf32>
    %8 = arith.addf %5, %7 : vector<8x16xf32>
    %cst_7 = arith.constant 0.000000e+00 : f32
    %9 = vector.broadcast %cst_7 : f32 to vector<8x16xf32>
    %10 = arith.maximumf %8, %9 : vector<8x16xf32>
    %11 = arith.truncf %10 : vector<8x16xf32> to vector<8x16xbf16>
    %c0_8 = arith.constant 0 : index
    %c0_9 = arith.constant 0 : index
    %12 = vector.load %arg5[%c0_8, %c0_9] : memref<8x16xbf16, #tpu.memory_space<vmem>>, vector<8x16xbf16>
    tpu.vector_store %arg5[%c0_8, %c0_9], %11 {strides = array<i32>} : memref<8x16xbf16, #tpu.memory_space<vmem>>, vector<8x16xbf16>,
    return
  }
  func.func @transform_0(%arg0: i32) -> (i32, i32) {
    %c0_i32 = arith.constant 0 : i32
    %c0_i32_0 = arith.constant 0 : i32
    return %arg0, %c0_i32 : i32, i32
  }
  func.func @transform_1(%arg0: i32) -> (i32, i32) {
    %c0_i32 = arith.constant 0 : i32
    %c0_i32_0 = arith.constant 0 : i32
    %c0_i32_1 = arith.constant 0 : i32
    return %c0_i32, %c0_i32_0 : i32, i32
  }
  func.func @transform_2(%arg0: i32) -> (i32, i32) {
    %c0_i32 = arith.constant 0 : i32
    %c0_i32_0 = arith.constant 0 : i32
    %c0_i32_1 = arith.constant 0 : i32
    return %c0_i32, %c0_i32_0 : i32, i32
  }
  func.func @transform_3(%arg0: i32) -> (i32, i32) {
    %c0_i32 = arith.constant 0 : i32
    %c0_i32_0 = arith.constant 0 : i32
    %c0_i32_1 = arith.constant 0 : i32
    return %c0_i32, %c0_i32_0 : i32, i32
  }
  func.func @transform_4(%arg0: i32) -> (i32, i32) {
    %c0_i32 = arith.constant 0 : i32
    %c0_i32_0 = arith.constant 0 : i32
    return %arg0, %c0_i32 : i32, i32
  }
}

</mosaic_0001>

<llo_original>
// kernel: tpu_custom_call.1
$region0: #{tpu_custom_call.1}
  #allocation0 [shape = 'u32[]', space=smem, size = 0x4, offset = 0x4, fixed_abs, tag = 'smem constant byte address 0x4 - core index']
  #allocation1 [shape = 'u32[144,128]{1,0:T(1,128)}', space=vmem, size = 0x12000, scoped, tag = 'internal scratch']
  %s0 = inlined_call_operand.hbm [shape: bf16[8,12], index: 0, kind: input, shape index: {}]
  %s1 = inlined_call_operand.hbm [shape: bf16[12,16], index: 1, kind: input, shape index: {}]
  %s2 = inlined_call_operand.vmem [shape: f32[1,16], index: 2, kind: input, shape index: {}]
  %s3 = inlined_call_operand.vmem [shape: f32[1,16], index: 3, kind: input, shape index: {}]
  %s4 = inlined_call_operand.hbm [shape: bf16[8,16], index: 4, kind: output, shape index: {}]
  %s5 = sld [smem:[#allocation0]]
  $region34: #{tpu_custom_call.1} parent=0
    _
  %s7 = ssub.s32 1, %s5
  %s8 = scalar_select 0, %s7, %s5
  $region1: #{tpu_custom_call.1} parent=0
    #allocation2 [shape = 'u8[2048]{0}', space=vmem, size = 0x800, scoped, tag = 'input window, operand 0, single buffered']
    #allocation3 [shape = 's32[1]{0}', space=sflag, size = 0x4, scoped, tag = 'scoped memory for tpu_custom_call.1']
    #allocation4 [shape = 's32[1]{0}', space=sflag, size = 0x4, scoped, tag = 'scoped memory for tpu_custom_call.1']
    #allocation5 [shape = 'u8[4096]{0}', space=vmem, size = 0x1000, scoped, tag = 'input window, operand 1, single buffered']
    #allocation6 [shape = 's32[1]{0}', space=sflag, size = 0x4, scoped, tag = 'scoped memory for tpu_custom_call.1']
    #allocation7 [shape = 'u8[2048]{0}', space=vmem, size = 0x800, scoped, tag = 'output window, operand 0, single buffered']
    %9 = vsyncpa [#allocation3], 0
    %10 = vsyncpa [#allocation6], 0
    %11 = vsyncpa [#allocation4], 0
    // Predicated region
    $region2: #{tpu_custom_call.1} parent=1 // pred_check
      _
    $region3: #{tpu_custom_call.1} parent=1 // pred_check_branch
      %13 = sbr.rel (0) target = $region5
    $region4: #{tpu_custom_call.1} parent=1 // pred_region
      %s15 = ssub.s32 64, 64
      %16 = vsyncadd [#allocation3], %s15
      %s18 = sshll.u32 [#allocation2], 4
      %s19 = int_to_ptr.vmem [resolvable:$true] %s18
      %21 = dma.hbm_to_vmem [thread:$0]  %s0, 64, %s19, [#allocation3]
    $region5: #{tpu_custom_call.1} parent=1 // pred_fallthru
      _
    // Predicated region
    $region6: #{tpu_custom_call.1} parent=1 // pred_check
      _
    $region7: #{tpu_custom_call.1} parent=1 // pred_check_branch
      %23 = sbr.rel (0) target = $region9
    $region8: #{tpu_custom_call.1} parent=1 // pred_region
      %s25 = ssub.s32 128, 128
      %26 = vsyncadd [#allocation6], %s25
      %s27 = sshll.u32 [#allocation5], 4
      %s28 = int_to_ptr.vmem [resolvable:$true] %s27
      %33 = dma.hbm_to_vmem [thread:$0]  %s1, 128, %s28, [#allocation6], 64, 64, 4
    $region9: #{tpu_custom_call.1} parent=1 // pred_fallthru
      _
    // Predicated region
    $region10: #{tpu_custom_call.1} parent=1 // pred_check
      _
    $region11: #{tpu_custom_call.1} parent=1 // pred_check_branch
      %35 = sbr.rel (0) target = $region13
    $region12: #{tpu_custom_call.1} parent=1 // pred_region
      _
    $region13: #{tpu_custom_call.1} parent=1 // pred_fallthru
      _
    // Predicated region
    $region14: #{tpu_custom_call.1} parent=1 // pred_check
      _
    $region15: #{tpu_custom_call.1} parent=1 // pred_check_branch
      %37 = sbr.rel (0) target = $region17
    $region16: #{tpu_custom_call.1} parent=1 // pred_region
      _
    $region17: #{tpu_custom_call.1} parent=1 // pred_fallthru
      _
    // Predicated region
    $region18: #{tpu_custom_call.1} parent=1 // pred_check
      _
    $region19: #{tpu_custom_call.1} parent=1 // pred_check_branch
      %39 = sbr.rel (0) target = $region21
    $region20: #{tpu_custom_call.1} parent=1 // pred_region
      %40 = dma.done [#allocation3], 64
    $region21: #{tpu_custom_call.1} parent=1 // pred_fallthru
      _
    // Predicated region
    $region22: #{tpu_custom_call.1} parent=1 // pred_check
      _
    $region23: #{tpu_custom_call.1} parent=1 // pred_check_branch
      %42 = sbr.rel (0) target = $region25
    $region24: #{tpu_custom_call.1} parent=1 // pred_region
      %43 = dma.done [#allocation6], 128
    $region25: #{tpu_custom_call.1} parent=1 // pred_fallthru
      _
    %v45 = vld [vmem:[#allocation2] sm:$0xf]
    %v46 = vld [vmem:[#allocation5] sm:$0xf]
    %v47 = vld [vmem:[#allocation5 + $0x4] sm:$0x3]
    %v50 = vunpack.c.l.b16 %v46
    %v51 = vunpack.c.l.b16 %v47
    %v52 = vpack.c.b16 %v51, %v50
    %vm53 = vcmask 97280
    %v55 = vsel %vm53, %v45, 0
    %vm57 = vcmask 1045504
    %v59 = vsel %vm57, %v52, 0
    %61 = vmatprep.subr.bf16.mxu0 0
    %62 = vmatpush1.bf16.msra.mxu0 0
    %63 = vmatprep.subr.bf16.mxu0 0
    %64 = vmatpush1.bf16.msra.mxu0 0
    %65 = vmatprep.subr.bf16.mxu0 0
    %66 = vmatpush1.bf16.msra.mxu0 0
    %67 = vmatprep.subr.bf16.mxu0 0
    %68 = vmatpush1.bf16.msra.mxu0 0
    %69 = vmatprep.subr.bf16.mxu0 0
    %70 = vmatpush1.bf16.msra.mxu0 0
    %71 = vmatprep.subr.bf16.mxu0 0
    %72 = vmatpush1.bf16.msra.mxu0 0
    %73 = vmatprep.subr.bf16.mxu0 0
    %74 = vmatpush1.bf16.msra.mxu0 0
    %75 = vmatprep.subr.bf16.mxu0 0
    %76 = vmatpush1.bf16.msra.mxu0 %v59
    %77 = vmatprep.subr.bf16.mxu0 0
    %78 = vmatpush2.bf16.msra.mxu0 0
    %79 = vmatprep.subr.bf16.mxu0 0
    %80 = vmatpush2.bf16.msra.mxu0 0
    %81 = vmatprep.subr.bf16.mxu0 0
    %82 = vmatpush2.bf16.msra.mxu0 0
    %83 = vmatprep.subr.bf16.mxu0 0
    %84 = vmatpush2.bf16.msra.mxu0 0
    %85 = vmatprep.subr.bf16.mxu0 0
    %86 = vmatpush2.bf16.msra.mxu0 0
    %87 = vmatprep.subr.bf16.mxu0 0
    %88 = vmatpush2.bf16.msra.mxu0 0
    %89 = vmatprep.subr.bf16.mxu0 0
    %90 = vmatpush2.bf16.msra.mxu0 0
    %91 = vmatprep.subr.bf16.mxu0 0
    %92 = vmatpush2.bf16.msra.mxu0 0
    %93 = vmatprep.mubr.bf16.mxu0 0
    %94 = vmatmul.mubr.bf16.gmra.mxu0 %v55
    %v95 = vpop.f32.mrf.mxu0
    %v96 = vadd.f32 0.0, %v95
    %v97 = vpop.f32.mrf.mxu0
    %v98 = vpop.f32.mrf.mxu0
    %v99 = vpop.f32.mrf.mxu0
    %100 = vdwg.mxu0
    %v101 = vld [vmem:[%s2] sm:$0x1]
    %v103 = vlaneseq
    %v104 = vshrl.u32 %v103, 7
    %v105 = vsub.s32 0, %v104
    %v106 = vrot.slane %v101, %v105
    %v108 = vmul.f32 %v96, %v106
    %v109 = vld [vmem:[%s3] sm:$0x1]
    %v111 = vlaneseq
    %v112 = vshrl.u32 %v111, 7
    %v113 = vsub.s32 0, %v112
    %v114 = vrot.slane %v109, %v113
    %v116 = vadd.f32 %v108, %v114
    %v117 = vmax.f32 %v116, 0.0
    %v118 = vpack.c.bf16 %v117, %v117
    %vm119 = vcmask 125952
    %120 = vst.msk [vmem:[#allocation7] sm:$0xf] %vm119, %v118
    // Predicated region
    $region26: #{tpu_custom_call.1} parent=1 // pred_check
      _
    $region27: #{tpu_custom_call.1} parent=1 // pred_check_branch
      %122 = sbr.rel (0) target = $region29
    $region28: #{tpu_custom_call.1} parent=1 // pred_region
      %s124 = ssub.s32 64, 64
      %125 = vsyncadd [#allocation4], %s124
      %s127 = sshll.u32 [#allocation7], 4
      %s128 = int_to_ptr.vmem [resolvable:$true] %s127
      %130 = dma.vmem_to_hbm [thread:$0]  %s128, 64, %s4, [#allocation4]
    $region29: #{tpu_custom_call.1} parent=1 // pred_fallthru
      _
    // Predicated region
    $region30: #{tpu_custom_call.1} parent=1 // pred_check
      _
    $region31: #{tpu_custom_call.1} parent=1 // pred_check_branch
      %132 = sbr.rel (0) target = $region33
    $region32: #{tpu_custom_call.1} parent=1 // pred_region
      %133 = dma.done [#allocation4], 64
    $region33: #{tpu_custom_call.1} parent=1 // pred_fallthru
      _
    %134 = vsyncpa [#allocation3], 1
    %135 = vsyncpa [#allocation6], 1
    %136 = vsyncpa [#allocation4], 1

</llo_original>
